<compile_context>
chip_gen: v7x
topology: tpu7x:2x2x1
jax: 0.10.0
libtpu: 0.0.40
codegen_flags: <defaults>
</compile_context>

<pallas_src>
import functools

import jax
import jax.numpy as jnp
from jax import lax
from jax.experimental import pallas as pl
from jax.experimental.pallas import tpu as pltpu

LANE = 128


def _round_up(x, m):
    return ((x + m - 1) // m) * m


def _full_spec(shape):
    # Full-array block for a grid-less pallas_call.
    return pl.BlockSpec(shape, lambda: (0,) * len(shape))


# ---------------------------------------------------------------------------
# Parameter preparation: pad / cast weights once, outside the kernel.
# ---------------------------------------------------------------------------
def prepare_core_params(w_i2h, b_i2h, w_h2h, b_h2h, compute_dtype=jnp.bfloat16):
    """w_i2h: [Din, H], w_h2h: [H, H] ([in, out] layout), biases: [H].

    Pads the output (N) dim of both weights to Hp = round_up(H, 128) so MXU
    columns / output stores are lane-dense, zero-pads the contraction rows of
    W_h2h to Hp (so an Hp-padded hidden state is mathematically inert), and
    folds the two biases into one f32 row (b_i2h + b_h2h)."""
    Din, H = w_i2h.shape
    Hp = _round_up(H, LANE)

    wi = jnp.zeros((Din, Hp), jnp.float32).at[:, :H].set(
        w_i2h.astype(jnp.float32)).astype(compute_dtype)
    wh = jnp.zeros((Hp, Hp), jnp.float32).at[:H, :H].set(
        w_h2h.astype(jnp.float32)).astype(compute_dtype)
    b = jnp.zeros((1, Hp), jnp.float32).at[0, :H].set(
        (b_i2h + b_h2h).astype(jnp.float32))

    return dict(wi=wi, wh=wh, b=b, Din=Din, H=H, Hp=Hp,
                compute_dtype=compute_dtype)


# ---------------------------------------------------------------------------
# Single-step kernel (exact CoreNetwork.forward semantics).
# ---------------------------------------------------------------------------
def core_step_kernel(g_ref, h_ref, wi_ref, wh_ref, b_ref, o_ref, *, H):
    cd = wi_ref.dtype
    gi = jnp.dot(g_ref[...].astype(cd), wi_ref[...],
                 preferred_element_type=jnp.float32)
    # Only the first H rows of W_h2h are meaningful for an unpadded h.
    hh = jnp.dot(h_ref[...].astype(cd), wh_ref[:H, :],
                 preferred_element_type=jnp.float32)
    o_ref[...] = jnp.maximum(gi + hh + b_ref[...], 0.0).astype(o_ref.dtype)


def core_network_forward(glimpse_hidden, recurrent_hidden, params):
    """glimpse_hidden: [B, Din], recurrent_hidden: [B, H] -> [B, H]."""
    B, Din = glimpse_hidden.shape
    H, Hp = params["H"], params["Hp"]

    out = pl.pallas_call(
        functools.partial(core_step_kernel, H=H),
        out_shape=jax.ShapeDtypeStruct((B, Hp), jnp.float32),
        grid=(),
        in_specs=[
            _full_spec((B, Din)),   # glimpse activations (f32, cast in-kernel)
            _full_spec((B, H)),     # recurrent activations (f32)
            _full_spec((Din, Hp)),  # W_i2h (bf16, N padded to 128 lanes)
            _full_spec((Hp, Hp)),   # W_h2h (bf16, rows >= H are zero)
            _full_spec((1, Hp)),    # folded bias (f32)
        ],
        out_specs=_full_spec((B, Hp)),
    )(glimpse_hidden, recurrent_hidden, params["wi"], params["wh"],
      params["b"])

    return out[:, :H].astype(recurrent_hidden.dtype)


# ---------------------------------------------------------------------------
# Fused recurrent loop: all T steps in ONE kernel invocation.
#   1) Hoisted input projection as a single GEMM (M = T*B).
#   2) Serial recurrence via an unrolled in-kernel fori_loop; h carried in f32.
# ---------------------------------------------------------------------------
def core_unrolled_kernel(g2d_ref, h0_ref, wi_ref, wh_ref, b_ref, o_ref,
                         gproj_ref, *, T, B, Hp):
    cd = wi_ref.dtype

    # ---- Hoisted input projection: one well-shaped GEMM for all steps. ----
    gproj = jnp.dot(g2d_ref[...].astype(cd), wi_ref[...],
                    preferred_element_type=jnp.float32) + b_ref[...]
    gproj_ref[...] = gproj.reshape(T, B, Hp)

    wh = wh_ref[...]    # resident for the whole loop
    h0 = h0_ref[...]    # f32, Hp-padded (pad lanes zero -> stay zero)

    # ---- Serial recurrence: h stays f32; only the MXU operand is bf16. ----
    def body(t, h):
        acc = jnp.dot(h.astype(cd), wh, preferred_element_type=jnp.float32)
        h_new = jnp.maximum(acc + gproj_ref[t], 0.0)
        o_ref[t] = h_new.astype(o_ref.dtype)
        return h_new

    lax.fori_loop(0, T, body, h0, unroll=True)


def core_network_unrolled(glimpse_seq, h0, params):
    """glimpse_seq: [T, B, Din], h0: [B, H] -> all hidden states [T, B, H]."""
    T, B, Din = glimpse_seq.shape
    H, Hp = params["H"], params["Hp"]

    g2d = glimpse_seq.reshape(T * B, Din)                      # GEMM rows M=T*B
    h0p = jnp.pad(h0.astype(jnp.float32), ((0, 0), (0, Hp - H)))

    out = pl.pallas_call(
        functools.partial(core_unrolled_kernel, T=T, B=B, Hp=Hp),
        out_shape=jax.ShapeDtypeStruct((T, B, Hp), jnp.float32),
        grid=(),
        in_specs=[
            _full_spec((T * B, Din)),  # all glimpse features (f32)
            _full_spec((B, Hp)),       # h0 (f32, lane-padded)
            _full_spec((Din, Hp)),     # W_i2h
            _full_spec((Hp, Hp)),      # W_h2h
            _full_spec((1, Hp)),       # folded bias
        ],
        out_specs=_full_spec((T, B, Hp)),
        scratch_shapes=[pltpu.VMEM((T, B, Hp), jnp.float32)],  # G[t] buffer
    )(g2d, h0p, params["wi"], params["wh"], params["b"])

    return out[:, :, :H]


# ---------------------------------------------------------------------------
# Init + reference
# ---------------------------------------------------------------------------
def init_linear_params(key, in_features, out_features, dtype=jnp.float32):
    """torch.nn.Linear-style init; weight returned as [in, out]."""
    kw, kb = jax.random.split(key)
    bound = 1.0 / (in_features ** 0.5)
    w = jax.random.uniform(kw, (in_features, out_features), dtype,
                           minval=-bound, maxval=bound)
    b = jax.random.uniform(kb, (out_features,), dtype,
                           minval=-bound, maxval=bound)
    return w, b


def ref_step(g, h, w_i2h, b_i2h, w_h2h, b_h2h, cd):
    """Pure-JAX reference mirroring the kernel's bf16 operand rounding."""
    gq = g.astype(cd).astype(jnp.float32)
    hq = h.astype(cd).astype(jnp.float32)
    wi = w_i2h.astype(cd).astype(jnp.float32)
    wh = w_h2h.astype(cd).astype(jnp.float32)
    return jax.nn.relu(gq @ wi + b_i2h + hq @ wh + b_h2h)


if __name__ == "__main__":
    glimpse_hid_dim = 32
    location_hid_dim = 32
    recurrent_hid_dim = 32
    batch = 8
    seq_len = 6

    in_dim = glimpse_hid_dim + location_hid_dim  # i2h input features

    key = jax.random.PRNGKey(0)
    k_g, k_h, k_i2h, k_h2h, k_seq = jax.random.split(key, 5)

    glimpse_hidden = jax.random.normal(k_g, (batch, in_dim), jnp.float32)
    recurrent_hidden = jax.random.normal(k_h, (batch, recurrent_hid_dim),
                                         jnp.float32)
    glimpse_seq = jax.random.normal(k_seq, (seq_len, batch, in_dim),
                                    jnp.float32)

    w_i2h, b_i2h = init_linear_params(k_i2h, in_dim, recurrent_hid_dim)
    w_h2h, b_h2h = init_linear_params(k_h2h, recurrent_hid_dim,
                                      recurrent_hid_dim)

    cd = jnp.bfloat16
    params = prepare_core_params(w_i2h, b_i2h, w_h2h, b_h2h, compute_dtype=cd)

    # ---- single-step forward (exact CoreNetwork.forward semantics) ----
    out = core_network_forward(glimpse_hidden, recurrent_hidden, params)
    out = jax.block_until_ready(out)
    ref = ref_step(glimpse_hidden, recurrent_hidden,
                   w_i2h, b_i2h, w_h2h, b_h2h, cd)
    assert out.shape == (batch, recurrent_hid_dim)
    assert jnp.allclose(out, ref, atol=1e-3, rtol=1e-3), \
        float(jnp.max(jnp.abs(out - ref)))

    # ---- fused recurrent loop (T applications of the same forward) ----
    outs = core_network_unrolled(glimpse_seq, recurrent_hidden, params)
    outs = jax.block_until_ready(outs)

    h = recurrent_hidden
    refs = []
    for t in range(seq_len):
        h = ref_step(glimpse_seq[t], h, w_i2h, b_i2h, w_h2h, b_h2h, cd)
        refs.append(h)
    refs = jnp.stack(refs)
    assert outs.shape == (seq_len, batch, recurrent_hid_dim)
    # h is carried in f32 inside the kernel now -> tight tolerance.
    assert jnp.allclose(outs, refs, atol=2e-3, rtol=2e-3), \
        float(jnp.max(jnp.abs(outs - refs)))

    print("KERNEL_OK")
</pallas_src>

<mosaic_0001>
module attributes {stable_mosaic.version = 11 : i64} {
  func.func @core_step_kernel(%arg0: memref<8x64xf32, #tpu.memory_space<vmem>>, %arg1: memref<8x32xf32, #tpu.memory_space<vmem>>, %arg2: memref<64x128xbf16, #tpu.memory_space<vmem>>, %arg3: memref<128x128xbf16, #tpu.memory_space<vmem>>, %arg4: memref<1x128xf32, #tpu.memory_space<vmem>>, %arg5: memref<8x128xf32, #tpu.memory_space<vmem>>) attributes {dimension_semantics = [], scalar_prefetch = 0 : i64, scratch_operands = 0 : i64, tpu.core_type = #tpu.core_type<tc>} {
    %c0 = arith.constant 0 : index
    %c0_0 = arith.constant 0 : index
    %0 = vector.load %arg0[%c0, %c0_0] : memref<8x64xf32, #tpu.memory_space<vmem>>, vector<8x64xf32>
    %1 = arith.truncf %0 : vector<8x64xf32> to vector<8x64xbf16>
    %c0_1 = arith.constant 0 : index
    %c0_2 = arith.constant 0 : index
    %2 = vector.load %arg2[%c0_1, %c0_2] : memref<64x128xbf16, #tpu.memory_space<vmem>>, vector<64x128xbf16>
    %cst = arith.constant dense<0.000000e+00> : vector<8x128xf32>
    %3 = tpu.matmul %1, %2, %cst {dimension_numbers = #tpu.dot_dimension_numbers<[1], [0], [0], [1], [0, 0, 1, 1], [], []>} : vector<8x64xbf16>, vector<64x128xbf16>, vector<8x128xf32> -> vector<8x128xf32>
    %c0_3 = arith.constant 0 : index
    %c0_4 = arith.constant 0 : index
    %4 = vector.load %arg1[%c0_3, %c0_4] : memref<8x32xf32, #tpu.memory_space<vmem>>, vector<8x32xf32>
    %5 = arith.truncf %4 : vector<8x32xf32> to vector<8x32xbf16>
    %c0_5 = arith.constant 0 : index
    %c0_6 = arith.constant 0 : index
    %6 = vector.load %arg3[%c0_5, %c0_6] : memref<128x128xbf16, #tpu.memory_space<vmem>>, vector<32x128xbf16>
    %cst_7 = arith.constant dense<0.000000e+00> : vector<8x128xf32>
    %7 = tpu.matmul %5, %6, %cst_7 {dimension_numbers = #tpu.dot_dimension_numbers<[1], [0], [0], [1], [0, 0, 1, 1], [], []>} : vector<8x32xbf16>, vector<32x128xbf16>, vector<8x128xf32> -> vector<8x128xf32>
    %8 = arith.addf %3, %7 : vector<8x128xf32>
    %c0_8 = arith.constant 0 : index
    %c0_9 = arith.constant 0 : index
    %9 = vector.load %arg4[%c0_8, %c0_9] : memref<1x128xf32, #tpu.memory_space<vmem>>, vector<1x128xf32>
    %10 = vector.broadcast %9 : vector<1x128xf32> to vector<8x128xf32>
    %11 = arith.addf %8, %10 : vector<8x128xf32>
    %cst_10 = arith.constant 0.000000e+00 : f32
    %12 = vector.broadcast %cst_10 : f32 to vector<8x128xf32>
    %13 = arith.maximumf %11, %12 : vector<8x128xf32>
    %c0_11 = arith.constant 0 : index
    %c0_12 = arith.constant 0 : index
    %14 = vector.load %arg5[%c0_11, %c0_12] : memref<8x128xf32, #tpu.memory_space<vmem>>, vector<8x128xf32>
    tpu.vector_store %arg5[%c0_11, %c0_12], %13 {strides = array<i32>} : memref<8x128xf32, #tpu.memory_space<vmem>>, vector<8x128xf32>,
    return
  }
}

</mosaic_0001>

<llo_original>
// kernel: tpu_custom_call.1
$region0: #{tpu_custom_call.1}
  #allocation0 [shape = 'u32[]', space=smem, size = 0x4, offset = 0x4, fixed_abs, tag = 'smem constant byte address 0x4 - core index']
  #allocation1 [shape = 'u32[144,128]{1,0:T(1,128)}', space=vmem, size = 0x12000, scoped, tag = 'internal scratch']
  %s0 = inlined_call_operand.hbm [shape: f32[8,64], index: 0, kind: input, shape index: {}]
  %s1 = inlined_call_operand.hbm [shape: f32[8,32], index: 1, kind: input, shape index: {}]
  %s2 = inlined_call_operand.hbm [shape: bf16[64,128], index: 2, kind: input, shape index: {}]
  %s3 = inlined_call_operand.hbm [shape: bf16[128,128], index: 3, kind: input, shape index: {}]
  %s4 = inlined_call_operand.vmem [shape: f32[1,128], index: 4, kind: input, shape index: {}]
  %s5 = inlined_call_operand.hbm [shape: f32[8,128], index: 5, kind: output, shape index: {}]
  %s6 = sld [smem:[#allocation0]]
  $region46: #{tpu_custom_call.1} parent=0
    _
  %s8 = ssub.s32 1, %s6
  %s9 = scalar_select 0, %s8, %s6
  $region1: #{tpu_custom_call.1} parent=0
    #allocation2 [shape = 'u8[4096]{0}', space=vmem, size = 0x1000, scoped, tag = 'input window, operand 0, single buffered']
    #allocation3 [shape = 's32[1]{0}', space=sflag, size = 0x4, scoped, tag = 'scoped memory for tpu_custom_call.1']
    #allocation4 [shape = 's32[1]{0}', space=sflag, size = 0x4, scoped, tag = 'scoped memory for tpu_custom_call.1']
    #allocation5 [shape = 'u8[4096]{0}', space=vmem, size = 0x1000, scoped, tag = 'input window, operand 1, single buffered']
    #allocation6 [shape = 's32[1]{0}', space=sflag, size = 0x4, scoped, tag = 'scoped memory for tpu_custom_call.1']
    #allocation7 [shape = 'u8[16384]{0}', space=vmem, size = 0x4000, scoped, tag = 'input window, operand 2, single buffered']
    #allocation8 [shape = 'u8[32768]{0}', space=vmem, size = 0x8000, scoped, tag = 'input window, operand 3, single buffered']
    #allocation9 [shape = 's32[1]{0}', space=sflag, size = 0x4, scoped, tag = 'scoped memory for tpu_custom_call.1']
    #allocation10 [shape = 'u8[4096]{0}', space=vmem, size = 0x1000, scoped, tag = 'output window, operand 0, single buffered']
    %10 = vsyncpa [#allocation3], 0
    %11 = vsyncpa [#allocation6], 0
    %12 = vsyncpa [#allocation9], 0
    %13 = vsyncpa [#allocation4], 0
    // Predicated region
    $region2: #{tpu_custom_call.1} parent=1 // pred_check
      _
    $region3: #{tpu_custom_call.1} parent=1 // pred_check_branch
      %15 = sbr.rel (0) target = $region5
    $region4: #{tpu_custom_call.1} parent=1 // pred_region
      %s17 = ssub.s32 128, 128
      %18 = vsyncadd [#allocation3], %s17
      %s20 = sshll.u32 [#allocation2], 4
      %s21 = int_to_ptr.vmem [resolvable:$true] %s20
      %23 = dma.hbm_to_vmem [thread:$0]  %s0, 128, %s21, [#allocation3]
    $region5: #{tpu_custom_call.1} parent=1 // pred_fallthru
      _
    // Predicated region
    $region6: #{tpu_custom_call.1} parent=1 // pred_check
      _
    $region7: #{tpu_custom_call.1} parent=1 // pred_check_branch
      %25 = sbr.rel (0) target = $region9
    $region8: #{tpu_custom_call.1} parent=1 // pred_region
      %s27 = ssub.s32 128, 128
      %28 = vsyncadd [#allocation6], %s27
      %s30 = sshll.u32 [#allocation5], 4
      %s31 = int_to_ptr.vmem [resolvable:$true] %s30
      %33 = dma.hbm_to_vmem [thread:$0]  %s1, 128, %s31, [#allocation6]
    $region9: #{tpu_custom_call.1} parent=1 // pred_fallthru
      _
    // Predicated region
    $region10: #{tpu_custom_call.1} parent=1 // pred_check
      _
    $region11: #{tpu_custom_call.1} parent=1 // pred_check_branch
      %35 = sbr.rel (0) target = $region13
    $region12: #{tpu_custom_call.1} parent=1 // pred_region
      %s37 = ssub.s32 512, 512
      %38 = vsyncadd [#allocation6], %s37
      %s39 = sshll.u32 [#allocation7], 4
      %s40 = int_to_ptr.vmem [resolvable:$true] %s39
      %45 = dma.hbm_to_vmem [thread:$0]  %s2, 512, %s40, [#allocation6], 64, 64, 4
    $region13: #{tpu_custom_call.1} parent=1 // pred_fallthru
      _
    // Predicated region
    $region14: #{tpu_custom_call.1} parent=1 // pred_check
      _
    $region15: #{tpu_custom_call.1} parent=1 // pred_check_branch
      %47 = sbr.rel (0) target = $region17
    $region16: #{tpu_custom_call.1} parent=1 // pred_region
      %s49 = ssub.s32 1024, 1024
      %50 = vsyncadd [#allocation9], %s49
      %s51 = sshll.u32 [#allocation8], 4
      %s52 = int_to_ptr.vmem [resolvable:$true] %s51
      %57 = dma.hbm_to_vmem [thread:$0]  %s3, 1024, %s52, [#allocation9], 64, 64, 4
    $region17: #{tpu_custom_call.1} parent=1 // pred_fallthru
      _
    // Predicated region
    $region18: #{tpu_custom_call.1} parent=1 // pred_check
      _
    $region19: #{tpu_custom_call.1} parent=1 // pred_check_branch
      %59 = sbr.rel (0) target = $region21
    $region20: #{tpu_custom_call.1} parent=1 // pred_region
      _
    $region21: #{tpu_custom_call.1} parent=1 // pred_fallthru
      _
    // Predicated region
    $region22: #{tpu_custom_call.1} parent=1 // pred_check
      _
    $region23: #{tpu_custom_call.1} parent=1 // pred_check_branch
      %61 = sbr.rel (0) target = $region25
    $region24: #{tpu_custom_call.1} parent=1 // pred_region
      %62 = dma.done [#allocation3], 128
    $region25: #{tpu_custom_call.1} parent=1 // pred_fallthru
      _
    // Predicated region
    $region26: #{tpu_custom_call.1} parent=1 // pred_check
      _
    $region27: #{tpu_custom_call.1} parent=1 // pred_check_branch
      %64 = sbr.rel (0) target = $region29
    $region28: #{tpu_custom_call.1} parent=1 // pred_region
      %65 = dma.done [#allocation6], 128
    $region29: #{tpu_custom_call.1} parent=1 // pred_fallthru
      _
    // Predicated region
    $region30: #{tpu_custom_call.1} parent=1 // pred_check
      _
    $region31: #{tpu_custom_call.1} parent=1 // pred_check_branch
      %67 = sbr.rel (0) target = $region33
    $region32: #{tpu_custom_call.1} parent=1 // pred_region
      %68 = dma.done [#allocation6], 512
    $region33: #{tpu_custom_call.1} parent=1 // pred_fallthru
      _
    // Predicated region
    $region34: #{tpu_custom_call.1} parent=1 // pred_check
      _
    $region35: #{tpu_custom_call.1} parent=1 // pred_check_branch
      %70 = sbr.rel (0) target = $region37
    $region36: #{tpu_custom_call.1} parent=1 // pred_region
      %71 = dma.done [#allocation9], 1024
    $region37: #{tpu_custom_call.1} parent=1 // pred_fallthru
      _
    %v73 = vld [vmem:[#allocation2] sm:$0xff]
    %v74 = vpack.c.bf16 %v73, %v73
    %v75 = vld [vmem:[#allocation7] sm:$0xf]
    %v76 = vld [vmem:[#allocation7 + $0x4] sm:$0xf]
    %v77 = vld [vmem:[#allocation7 + $0x8] sm:$0xf]
    %v78 = vld [vmem:[#allocation7 + $0xc] sm:$0xf]
    %v79 = vld [vmem:[#allocation7 + $0x10] sm:$0xf]
    %v80 = vld [vmem:[#allocation7 + $0x14] sm:$0xf]
    %v81 = vld [vmem:[#allocation7 + $0x18] sm:$0xf]
    %v82 = vld [vmem:[#allocation7 + $0x1c] sm:$0xf]
    %v83 = vld [vmem:[#allocation5] sm:$0xff]
    %v84 = vpack.c.bf16 %v83, %v83
    %v85 = vld [vmem:[#allocation8] sm:$0xf]
    %v86 = vld [vmem:[#allocation8 + $0x4] sm:$0xf]
    %v87 = vld [vmem:[#allocation8 + $0x8] sm:$0xf]
    %v88 = vld [vmem:[#allocation8 + $0xc] sm:$0xf]
    %v93 = vunpack.c.l.b16 %v85
    %v94 = vunpack.c.l.b16 %v86
    %v95 = vunpack.c.l.b16 %v87
    %v96 = vunpack.c.l.b16 %v88
    %v97 = vpack.c.b16 %v94, %v93
    %v98 = vpack.c.b16 %v96, %v95
    %vm101 = vcmask 261120
    %v103 = vsel %vm101, %v84, 0
    %105 = vmatprep.subr.bf16.mxu0 0
    %106 = vmatpush1.bf16.msra.mxu0 %v97
    %107 = vmatprep.subr.bf16.mxu0 0
    %108 = vmatpush1.bf16.msra.mxu0 %v98
    %109 = vmatprep.subr.bf16.mxu0 0
    %110 = vmatpush1.bf16.msra.mxu0 0
    %111 = vmatprep.subr.bf16.mxu0 0
    %112 = vmatpush1.bf16.msra.mxu0 0
    %113 = vmatprep.subr.bf16.mxu0 0
    %114 = vmatpush1.bf16.msra.mxu0 0
    %115 = vmatprep.subr.bf16.mxu0 0
    %116 = vmatpush1.bf16.msra.mxu0 0
    %117 = vmatprep.subr.bf16.mxu0 0
    %118 = vmatpush1.bf16.msra.mxu0 0
    %119 = vmatprep.subr.bf16.mxu0 0
    %120 = vmatpush1.bf16.msra.mxu0 0
    %121 = vmatprep.subr.bf16.mxu0 0
    %122 = vmatpush1.bf16.msra.mxu0 0
    %123 = vmatprep.subr.bf16.mxu0 0
    %124 = vmatpush1.bf16.msra.mxu0 0
    %125 = vmatprep.subr.bf16.mxu0 0
    %126 = vmatpush1.bf16.msra.mxu0 0
    %127 = vmatprep.subr.bf16.mxu0 0
    %128 = vmatpush1.bf16.msra.mxu0 0
    %129 = vmatprep.subr.bf16.mxu0 0
    %130 = vmatpush1.bf16.msra.mxu0 0
    %131 = vmatprep.subr.bf16.mxu0 0
    %132 = vmatpush1.bf16.msra.mxu0 0
    %133 = vmatprep.subr.bf16.mxu0 0
    %134 = vmatpush1.bf16.msra.mxu0 0
    %135 = vmatprep.subr.bf16.mxu0 0
    %136 = vmatpush1.bf16.msra.mxu0 0
    %137 = vmatprep.mubr.bf16.mxu0 0
    %138 = vmatmul.mubr.bf16.gmra.mrb[0].mxu0 %v103
    %v139 = vpop.f32.mrb[0].mxu0
    %v140 = vadd.f32 0.0, %v139
    %v141 = vpop.f32.mrb[0].mxu0
    %v142 = vpop.f32.mrb[0].mxu0
    %v143 = vpop.f32.mrb[0].mxu0
    %144 = vdwg.mxu0
    %v153 = vunpack.c.l.b16 %v75
    %v154 = vunpack.c.l.b16 %v76
    %v155 = vunpack.c.l.b16 %v77
    %v156 = vunpack.c.l.b16 %v78
    %v157 = vunpack.c.l.b16 %v79
    %v158 = vunpack.c.l.b16 %v80
    %v159 = vunpack.c.l.b16 %v81
    %v160 = vunpack.c.l.b16 %v82
    %v161 = vpack.c.b16 %v154, %v153
    %v162 = vpack.c.b16 %v156, %v155
    %v163 = vpack.c.b16 %v158, %v157
    %v164 = vpack.c.b16 %v160, %v159
    %vm169 = vcmask 523264
    %v171 = vsel %vm169, %v74, 0
    %173 = vmatprep.subr.bf16.mxu0 0
    %174 = vmatpush1.bf16.msra.mxu0 %v161
    %175 = vmatprep.subr.bf16.mxu0 0
    %176 = vmatpush1.bf16.msra.mxu0 %v162
    %177 = vmatprep.subr.bf16.mxu0 0
    %178 = vmatpush1.bf16.msra.mxu0 %v163
    %179 = vmatprep.subr.bf16.mxu0 0
    %180 = vmatpush1.bf16.msra.mxu0 %v164
    %181 = vmatprep.subr.bf16.mxu0 0
    %182 = vmatpush1.bf16.msra.mxu0 0
    %183 = vmatprep.subr.bf16.mxu0 0
    %184 = vmatpush1.bf16.msra.mxu0 0
    %185 = vmatprep.subr.bf16.mxu0 0
    %186 = vmatpush1.bf16.msra.mxu0 0
    %187 = vmatprep.subr.bf16.mxu0 0
    %188 = vmatpush1.bf16.msra.mxu0 0
    %189 = vmatprep.subr.bf16.mxu0 0
    %190 = vmatpush1.bf16.msra.mxu0 0
    %191 = vmatprep.subr.bf16.mxu0 0
    %192 = vmatpush1.bf16.msra.mxu0 0
    %193 = vmatprep.subr.bf16.mxu0 0
    %194 = vmatpush1.bf16.msra.mxu0 0
    %195 = vmatprep.subr.bf16.mxu0 0
    %196 = vmatpush1.bf16.msra.mxu0 0
    %197 = vmatprep.subr.bf16.mxu0 0
    %198 = vmatpush1.bf16.msra.mxu0 0
    %199 = vmatprep.subr.bf16.mxu0 0
    %200 = vmatpush1.bf16.msra.mxu0 0
    %201 = vmatprep.subr.bf16.mxu0 0
    %202 = vmatpush1.bf16.msra.mxu0 0
    %203 = vmatprep.subr.bf16.mxu0 0
    %204 = vmatpush1.bf16.msra.mxu0 0
    %205 = vmatprep.mubr.bf16.mxu0 0
    %206 = vmatmul.mubr.bf16.gmra.mrb[0].mxu0 %v171
    %v207 = vpop.f32.mrb[0].mxu0
    %v208 = vadd.f32 %v140, %v207
    %v209 = vpop.f32.mrb[0].mxu0
    %v210 = vpop.f32.mrb[0].mxu0
    %v211 = vpop.f32.mrb[0].mxu0
    %212 = vdwg.mxu0
    %v213 = vld [vmem:[%s4] sm:$0x1]
    %v215 = vlaneseq
    %v216 = vshrl.u32 %v215, 7
    %v217 = vsub.s32 0, %v216
    %v218 = vrot.slane %v213, %v217
    %v220 = vadd.f32 %v208, %v218
    %v221 = vmax.f32 %v220, 0.0
    %222 = vst [vmem:[#allocation10] sm:$0xff] %v221
    // Predicated region
    $region38: #{tpu_custom_call.1} parent=1 // pred_check
      _
    $region39: #{tpu_custom_call.1} parent=1 // pred_check_branch
      %224 = sbr.rel (0) target = $region41
    $region40: #{tpu_custom_call.1} parent=1 // pred_region
      %s226 = ssub.s32 128, 128
      %227 = vsyncadd [#allocation4], %s226
      %s229 = sshll.u32 [#allocation10], 4
      %s230 = int_to_ptr.vmem [resolvable:$true] %s229
      %232 = dma.vmem_to_hbm [thread:$0]  %s230, 128, %s5, [#allocation4]
    $region41: #{tpu_custom_call.1} parent=1 // pred_fallthru
      _
    // Predicated region
    $region42: #{tpu_custom_call.1} parent=1 // pred_check
      _
    $region43: #{tpu_custom_call.1} parent=1 // pred_check_branch
      %234 = sbr.rel (0) target = $region45
    $region44: #{tpu_custom_call.1} parent=1 // pred_region
      %235 = dma.done [#allocation4], 128
    $region45: #{tpu_custom_call.1} parent=1 // pred_fallthru
      _
    %236 = vsyncpa [#allocation3], 1
    %237 = vsyncpa [#allocation6], 1
    %238 = vsyncpa [#allocation9], 1
    %239 = vsyncpa [#allocation4], 1

</llo_original>
